<compile_context>
chip_gen: v5e
topology: v5e:2x2
jax: 0.10.0
libtpu: 0.0.40
codegen_flags: <defaults>
</compile_context>

<pallas_src>
import jax
import jax.numpy as jnp
from jax.experimental import pallas as pl
from jax.experimental.pallas import tpu as pltpu


def _attention_bagging_kernel(x_ref, xsub_ref, w1_ref, b1_ref, w2_ref, b2_ref,
                              wa_ref, ba_ref, rep_ref, sum_ref,
                              bag_ref, out_ref):
    # ---- attention softmax over bags (computed exactly once) ----
    logits = jnp.dot(x_ref[...], wa_ref[...],
                     preferred_element_type=jnp.float32) + ba_ref[...]        # (B, N)
    m = jnp.max(logits, axis=-1, keepdims=True)
    e = jnp.exp(logits - m)
    # exact divide: runs once on a tiny (B, N) array; keeps 1e-5 agreement with reference
    attn = e / jnp.sum(e, axis=-1, keepdims=True)                             # (B, N)

    # ---- all bags fused: block-diag Linear -> ReLU6 -> block-diag Linear ----
    h = jnp.dot(xsub_ref[...], w1_ref[...],
                preferred_element_type=jnp.float32) + b1_ref[...]             # (B, N*H)
    h = jnp.clip(h, 0.0, 6.0)                                                 # ReLU6
    y = jnp.dot(h, w2_ref[...],
                preferred_element_type=jnp.float32) + b2_ref[...]             # (B, N*out)

    # ---- attention weighting: expand attn to lanes via kron(I_N, 1_out) matmul ----
    attn_exp = jnp.dot(attn, rep_ref[...],
                       preferred_element_type=jnp.float32)                    # (B, N*out)
    weighted = y * attn_exp

    # lane-dense per-bag output slab
    bag_ref[...] = weighted.astype(bag_ref.dtype)
    # sum over bags via tile(I_out, (N, 1)) matmul
    out_ref[...] = jnp.dot(weighted, sum_ref[...],
                           preferred_element_type=jnp.float32).astype(out_ref.dtype)


def _block_diag(blocks):
    n = len(blocks)
    r, c = blocks[0].shape
    out = jnp.zeros((n * r, n * c), blocks[0].dtype)
    for i, b in enumerate(blocks):
        out = out.at[i * r:(i + 1) * r, i * c:(i + 1) * c].set(b)
    return out


def attention_bagging_pallas(x, x_sub, W1, b1, W2, b2, Wa, ba):
    bagging_num, B, sub_dim = x_sub.shape
    H = W1.shape[-1]
    out_dim = W2.shape[-1]
    input_dim = x.shape[-1]

    # ---- glue / parameter prep in plain JAX (fuses bags into block-diagonal weights) ----
    xsub_cat = jnp.transpose(x_sub, (1, 0, 2)).reshape(B, bagging_num * sub_dim)
    W1_bd = _block_diag([W1[n] for n in range(bagging_num)])          # (N*sub, N*H)
    W2_bd = _block_diag([W2[n] for n in range(bagging_num)])          # (N*H, N*out)
    b1_cat = b1.reshape(1, bagging_num * H)
    b2_cat = b2.reshape(1, bagging_num * out_dim)
    # attention lane-expansion and bag-sum matrices (constants)
    rep = jnp.kron(jnp.eye(bagging_num, dtype=jnp.float32),
                   jnp.ones((1, out_dim), jnp.float32))               # (N, N*out)
    sumI = jnp.tile(jnp.eye(out_dim, dtype=jnp.float32),
                    (bagging_num, 1))                                 # (N*out, out)

    grid_spec = pltpu.PrefetchScalarGridSpec(
        num_scalar_prefetch=0,
        grid=(1,),  # single step: all bags fused; everything resident in VMEM
        in_specs=[
            pl.BlockSpec((B, input_dim), lambda i: (0, 0)),
            pl.BlockSpec((B, bagging_num * sub_dim), lambda i: (0, 0)),
            pl.BlockSpec((bagging_num * sub_dim, bagging_num * H), lambda i: (0, 0)),
            pl.BlockSpec((1, bagging_num * H), lambda i: (0, 0)),
            pl.BlockSpec((bagging_num * H, bagging_num * out_dim), lambda i: (0, 0)),
            pl.BlockSpec((1, bagging_num * out_dim), lambda i: (0, 0)),
            pl.BlockSpec((input_dim, bagging_num), lambda i: (0, 0)),
            pl.BlockSpec((1, bagging_num), lambda i: (0, 0)),
            pl.BlockSpec((bagging_num, bagging_num * out_dim), lambda i: (0, 0)),
            pl.BlockSpec((bagging_num * out_dim, out_dim), lambda i: (0, 0)),
        ],
        out_specs=[
            pl.BlockSpec((B, bagging_num * out_dim), lambda i: (0, 0)),
            pl.BlockSpec((B, out_dim), lambda i: (0, 0)),
        ],
    )

    out_shapes = (
        jax.ShapeDtypeStruct((B, bagging_num * out_dim), jnp.float32),
        jax.ShapeDtypeStruct((B, out_dim), jnp.float32),
    )

    bag_slab, output = pl.pallas_call(
        _attention_bagging_kernel,
        out_shape=out_shapes,
        grid_spec=grid_spec,
        compiler_params=pltpu.CompilerParams(
            dimension_semantics=("arbitrary",)),
    )(x, xsub_cat, W1_bd, b1_cat, W2_bd, b2_cat, Wa, ba, rep, sumI)

    # reshape lane-dense slab back to the (bagging_num, B, out_dim) interface (glue)
    bagging = jnp.transpose(bag_slab.reshape(B, bagging_num, out_dim), (1, 0, 2))
    return bagging, output


def attention_bagging_reference(x, x_sub, W1, b1, W2, b2, Wa, ba):
    logits = x @ Wa + ba                                   # (B, N)
    attn = jax.nn.softmax(logits, axis=-1)                 # nn.Softmax() -> dim=1 on 2D input
    h = jnp.einsum('nbs,nsh->nbh', x_sub, W1) + b1[:, None, :]
    h = jnp.clip(h, 0.0, 6.0)
    y = jnp.einsum('nbh,nho->nbo', h, W2) + b2[:, None, :]
    weighted = y * attn.T[:, :, None]
    out = weighted.sum(axis=0)
    return weighted, out


if __name__ == "__main__":
    # Small, forward-consistent shapes.
    B = 8
    input_dim = 32
    output_dim = 8
    bagging_num = 4
    bagging_rate = 0.5
    hidden = 32
    sub_dim = int(input_dim * bagging_rate)

    key = jax.random.PRNGKey(0)
    keys = jax.random.split(key, 16)

    x = jax.random.normal(keys[0], (B, input_dim), jnp.float32)

    # Deterministic stand-in for AttentionBagging.random_select (column subsets per bag).
    # TODO(synk): torch.index_select / random column-subset gather stays outside the kernel.
    index_list = [
        jax.random.permutation(keys[1 + i], input_dim)[:sub_dim]
        for i in range(bagging_num)
    ]
    x_sub = jnp.stack([x[:, idx] for idx in index_list], axis=0)  # (N, B, sub_dim)

    # Deterministic parameter init (synthetic; no checkpoint loading).
    W1 = 0.1 * jax.random.normal(keys[6], (bagging_num, sub_dim, hidden), jnp.float32)
    b1 = 0.1 * jax.random.normal(keys[7], (bagging_num, hidden), jnp.float32)
    W2 = 0.1 * jax.random.normal(keys[8], (bagging_num, hidden, output_dim), jnp.float32)
    b2 = 0.1 * jax.random.normal(keys[9], (bagging_num, output_dim), jnp.float32)
    Wa = 0.1 * jax.random.normal(keys[10], (input_dim, bagging_num), jnp.float32)
    ba = 0.1 * jax.random.normal(keys[11], (1, bagging_num), jnp.float32)

    bagging_out, output = attention_bagging_pallas(x, x_sub, W1, b1, W2, b2, Wa, ba)
    jax.block_until_ready((bagging_out, output))

    ref_bagging, ref_output = attention_bagging_reference(x, x_sub, W1, b1, W2, b2, Wa, ba)
    assert jnp.allclose(bagging_out, ref_bagging, atol=1e-5, rtol=1e-5)
    assert jnp.allclose(output, ref_output, atol=1e-5, rtol=1e-5)

    print("KERNEL_OK")
</pallas_src>

<mosaic_0001>
module attributes {stable_mosaic.version = 11 : i64} {
  func.func @_attention_bagging_kernel(%arg0: i32, %arg1: memref<8x32xf32, #tpu.memory_space<vmem>>, %arg2: memref<8x64xf32, #tpu.memory_space<vmem>>, %arg3: memref<64x128xf32, #tpu.memory_space<vmem>>, %arg4: memref<1x128xf32, #tpu.memory_space<vmem>>, %arg5: memref<128x32xf32, #tpu.memory_space<vmem>>, %arg6: memref<1x32xf32, #tpu.memory_space<vmem>>, %arg7: memref<32x4xf32, #tpu.memory_space<vmem>>, %arg8: memref<1x4xf32, #tpu.memory_space<vmem>>, %arg9: memref<4x32xf32, #tpu.memory_space<vmem>>, %arg10: memref<32x8xf32, #tpu.memory_space<vmem>>, %arg11: memref<8x32xf32, #tpu.memory_space<vmem>>, %arg12: memref<8x8xf32, #tpu.memory_space<vmem>>) attributes {dimension_semantics = [#tpu.dimension_semantics<arbitrary>], iteration_bounds = array<i64: 1>, scalar_prefetch = 0 : i64, scratch_operands = 0 : i64, tpu.core_type = #tpu.core_type<tc>, window_params = [{pipeline_mode = #tpu.pipeline_mode<synchronous>, transform_indices = @transform_0, window_bounds = array<i64: 8, 32>}, {pipeline_mode = #tpu.pipeline_mode<synchronous>, transform_indices = @transform_1, window_bounds = array<i64: 8, 64>}, {pipeline_mode = #tpu.pipeline_mode<synchronous>, transform_indices = @transform_2, window_bounds = array<i64: 64, 128>}, {pipeline_mode = #tpu.pipeline_mode<synchronous>, transform_indices = @transform_3, window_bounds = array<i64: 1, 128>}, {pipeline_mode = #tpu.pipeline_mode<synchronous>, transform_indices = @transform_4, window_bounds = array<i64: 128, 32>}, {pipeline_mode = #tpu.pipeline_mode<synchronous>, transform_indices = @transform_5, window_bounds = array<i64: 1, 32>}, {pipeline_mode = #tpu.pipeline_mode<synchronous>, transform_indices = @transform_6, window_bounds = array<i64: 32, 4>}, {pipeline_mode = #tpu.pipeline_mode<synchronous>, transform_indices = @transform_7, window_bounds = array<i64: 1, 4>}, {pipeline_mode = #tpu.pipeline_mode<synchronous>, transform_indices = @transform_8, window_bounds = array<i64: 4, 32>}, {pipeline_mode = #tpu.pipeline_mode<synchronous>, transform_indices = @transform_9, window_bounds = array<i64: 32, 8>}, {pipeline_mode = #tpu.pipeline_mode<synchronous>, transform_indices = @transform_10, window_bounds = array<i64: 8, 32>}, {pipeline_mode = #tpu.pipeline_mode<synchronous>, transform_indices = @transform_11, window_bounds = array<i64: 8, 8>}]} {
    %c0 = arith.constant 0 : index
    %c0_0 = arith.constant 0 : index
    %0 = vector.load %arg1[%c0, %c0_0] : memref<8x32xf32, #tpu.memory_space<vmem>>, vector<8x32xf32>
    %c0_1 = arith.constant 0 : index
    %c0_2 = arith.constant 0 : index
    %1 = vector.load %arg7[%c0_1, %c0_2] : memref<32x4xf32, #tpu.memory_space<vmem>>, vector<32x4xf32>
    %cst = arith.constant dense<0.000000e+00> : vector<8x4xf32>
    %2 = tpu.matmul %0, %1, %cst {dimension_numbers = #tpu.dot_dimension_numbers<[1], [0], [0], [1], [0, 0, 1, 1], [], []>} : vector<8x32xf32>, vector<32x4xf32>, vector<8x4xf32> -> vector<8x4xf32>
    %c0_3 = arith.constant 0 : index
    %c0_4 = arith.constant 0 : index
    %3 = vector.load %arg8[%c0_3, %c0_4] : memref<1x4xf32, #tpu.memory_space<vmem>>, vector<1x4xf32>
    %4 = vector.broadcast %3 : vector<1x4xf32> to vector<8x4xf32>
    %5 = arith.addf %2, %4 : vector<8x4xf32>
    %cst_5 = arith.constant dense<0xFF800000> : vector<8xf32>
    %6 = vector.multi_reduction <maximumf>, %5, %cst_5 [1] : vector<8x4xf32> to vector<8xf32>
    %7 = vector.shape_cast %6 : vector<8xf32> to vector<8x1xf32>
    %8 = vector.broadcast %7 : vector<8x1xf32> to vector<8x4xf32>
    %9 = arith.subf %5, %8 : vector<8x4xf32>
    %10 = math.exp %9 : vector<8x4xf32>
    %cst_6 = arith.constant dense<0.000000e+00> : vector<8xf32>
    %11 = vector.multi_reduction <add>, %10, %cst_6 [1] : vector<8x4xf32> to vector<8xf32>
    %12 = vector.shape_cast %11 : vector<8xf32> to vector<8x1xf32>
    %13 = vector.broadcast %12 : vector<8x1xf32> to vector<8x4xf32>
    %14 = arith.divf %10, %13 : vector<8x4xf32>
    %c0_7 = arith.constant 0 : index
    %c0_8 = arith.constant 0 : index
    %15 = vector.load %arg2[%c0_7, %c0_8] : memref<8x64xf32, #tpu.memory_space<vmem>>, vector<8x64xf32>
    %c0_9 = arith.constant 0 : index
    %c0_10 = arith.constant 0 : index
    %16 = vector.load %arg3[%c0_9, %c0_10] : memref<64x128xf32, #tpu.memory_space<vmem>>, vector<64x128xf32>
    %cst_11 = arith.constant dense<0.000000e+00> : vector<8x128xf32>
    %17 = tpu.matmul %15, %16, %cst_11 {dimension_numbers = #tpu.dot_dimension_numbers<[1], [0], [0], [1], [0, 0, 1, 1], [], []>} : vector<8x64xf32>, vector<64x128xf32>, vector<8x128xf32> -> vector<8x128xf32>
    %c0_12 = arith.constant 0 : index
    %c0_13 = arith.constant 0 : index
    %18 = vector.load %arg4[%c0_12, %c0_13] : memref<1x128xf32, #tpu.memory_space<vmem>>, vector<1x128xf32>
    %19 = vector.broadcast %18 : vector<1x128xf32> to vector<8x128xf32>
    %20 = arith.addf %17, %19 : vector<8x128xf32>
    %cst_14 = arith.constant 0.000000e+00 : f32
    %cst_15 = arith.constant 6.000000e+00 : f32
    %21 = vector.broadcast %cst_14 : f32 to vector<8x128xf32>
    %22 = arith.maximumf %21, %20 : vector<8x128xf32>
    %23 = vector.broadcast %cst_15 : f32 to vector<8x128xf32>
    %24 = arith.minimumf %23, %22 : vector<8x128xf32>
    %c0_16 = arith.constant 0 : index
    %c0_17 = arith.constant 0 : index
    %25 = vector.load %arg5[%c0_16, %c0_17] : memref<128x32xf32, #tpu.memory_space<vmem>>, vector<128x32xf32>
    %cst_18 = arith.constant dense<0.000000e+00> : vector<8x32xf32>
    %26 = tpu.matmul %24, %25, %cst_18 {dimension_numbers = #tpu.dot_dimension_numbers<[1], [0], [0], [1], [0, 0, 1, 1], [], []>} : vector<8x128xf32>, vector<128x32xf32>, vector<8x32xf32> -> vector<8x32xf32>
    %c0_19 = arith.constant 0 : index
    %c0_20 = arith.constant 0 : index
    %27 = vector.load %arg6[%c0_19, %c0_20] : memref<1x32xf32, #tpu.memory_space<vmem>>, vector<1x32xf32>
    %28 = vector.broadcast %27 : vector<1x32xf32> to vector<8x32xf32>
    %29 = arith.addf %26, %28 : vector<8x32xf32>
    %c0_21 = arith.constant 0 : index
    %c0_22 = arith.constant 0 : index
    %30 = vector.load %arg9[%c0_21, %c0_22] : memref<4x32xf32, #tpu.memory_space<vmem>>, vector<4x32xf32>
    %cst_23 = arith.constant dense<0.000000e+00> : vector<8x32xf32>
    %31 = tpu.matmul %14, %30, %cst_23 {dimension_numbers = #tpu.dot_dimension_numbers<[1], [0], [0], [1], [0, 0, 1, 1], [], []>} : vector<8x4xf32>, vector<4x32xf32>, vector<8x32xf32> -> vector<8x32xf32>
    %32 = arith.mulf %29, %31 : vector<8x32xf32>
    %c0_24 = arith.constant 0 : index
    %c0_25 = arith.constant 0 : index
    %33 = vector.load %arg11[%c0_24, %c0_25] : memref<8x32xf32, #tpu.memory_space<vmem>>, vector<8x32xf32>
    tpu.vector_store %arg11[%c0_24, %c0_25], %32 {strides = array<i32>} : memref<8x32xf32, #tpu.memory_space<vmem>>, vector<8x32xf32>,
    %c0_26 = arith.constant 0 : index
    %c0_27 = arith.constant 0 : index
    %34 = vector.load %arg10[%c0_26, %c0_27] : memref<32x8xf32, #tpu.memory_space<vmem>>, vector<32x8xf32>
    %cst_28 = arith.constant dense<0.000000e+00> : vector<8x8xf32>
    %35 = tpu.matmul %32, %34, %cst_28 {dimension_numbers = #tpu.dot_dimension_numbers<[1], [0], [0], [1], [0, 0, 1, 1], [], []>} : vector<8x32xf32>, vector<32x8xf32>, vector<8x8xf32> -> vector<8x8xf32>
    %c0_29 = arith.constant 0 : index
    %c0_30 = arith.constant 0 : index
    %36 = vector.load %arg12[%c0_29, %c0_30] : memref<8x8xf32, #tpu.memory_space<vmem>>, vector<8x8xf32>
    tpu.vector_store %arg12[%c0_29, %c0_30], %35 {strides = array<i32>} : memref<8x8xf32, #tpu.memory_space<vmem>>, vector<8x8xf32>,
    return
  }
  func.func @transform_0(%arg0: i32) -> (i32, i32) {
    %c0_i32 = arith.constant 0 : i32
    %c0_i32_0 = arith.constant 0 : i32
    %c0_i32_1 = arith.constant 0 : i32
    return %c0_i32, %c0_i32_0 : i32, i32
  }
  func.func @transform_1(%arg0: i32) -> (i32, i32) {
    %c0_i32 = arith.constant 0 : i32
    %c0_i32_0 = arith.constant 0 : i32
    %c0_i32_1 = arith.constant 0 : i32
    return %c0_i32, %c0_i32_0 : i32, i32
  }
  func.func @transform_2(%arg0: i32) -> (i32, i32) {
    %c0_i32 = arith.constant 0 : i32
    %c0_i32_0 = arith.constant 0 : i32
    %c0_i32_1 = arith.constant 0 : i32
    return %c0_i32, %c0_i32_0 : i32, i32
  }
  func.func @transform_3(%arg0: i32) -> (i32, i32) {
    %c0_i32 = arith.constant 0 : i32
    %c0_i32_0 = arith.constant 0 : i32
    %c0_i32_1 = arith.constant 0 : i32
    return %c0_i32, %c0_i32_0 : i32, i32
  }
  func.func @transform_4(%arg0: i32) -> (i32, i32) {
    %c0_i32 = arith.constant 0 : i32
    %c0_i32_0 = arith.constant 0 : i32
    %c0_i32_1 = arith.constant 0 : i32
    return %c0_i32, %c0_i32_0 : i32, i32
  }
  func.func @transform_5(%arg0: i32) -> (i32, i32) {
    %c0_i32 = arith.constant 0 : i32
    %c0_i32_0 = arith.constant 0 : i32
    %c0_i32_1 = arith.constant 0 : i32
    return %c0_i32, %c0_i32_0 : i32, i32
  }
  func.func @transform_6(%arg0: i32) -> (i32, i32) {
    %c0_i32 = arith.constant 0 : i32
    %c0_i32_0 = arith.constant 0 : i32
    %c0_i32_1 = arith.constant 0 : i32
    return %c0_i32, %c0_i32_0 : i32, i32
  }
  func.func @transform_7(%arg0: i32) -> (i32, i32) {
    %c0_i32 = arith.constant 0 : i32
    %c0_i32_0 = arith.constant 0 : i32
    %c0_i32_1 = arith.constant 0 : i32
    return %c0_i32, %c0_i32_0 : i32, i32
  }
  func.func @transform_8(%arg0: i32) -> (i32, i32) {
    %c0_i32 = arith.constant 0 : i32
    %c0_i32_0 = arith.constant 0 : i32
    %c0_i32_1 = arith.constant 0 : i32
    return %c0_i32, %c0_i32_0 : i32, i32
  }
  func.func @transform_9(%arg0: i32) -> (i32, i32) {
    %c0_i32 = arith.constant 0 : i32
    %c0_i32_0 = arith.constant 0 : i32
    %c0_i32_1 = arith.constant 0 : i32
    return %c0_i32, %c0_i32_0 : i32, i32
  }
  func.func @transform_10(%arg0: i32) -> (i32, i32) {
    %c0_i32 = arith.constant 0 : i32
    %c0_i32_0 = arith.constant 0 : i32
    %c0_i32_1 = arith.constant 0 : i32
    return %c0_i32, %c0_i32_0 : i32, i32
  }
  func.func @transform_11(%arg0: i32) -> (i32, i32) {
    %c0_i32 = arith.constant 0 : i32
    %c0_i32_0 = arith.constant 0 : i32
    %c0_i32_1 = arith.constant 0 : i32
    return %c0_i32, %c0_i32_0 : i32, i32
  }
}

</mosaic_0001>

<llo_original>
// kernel: tpu_custom_call.1
$region0: #{tpu_custom_call.1}
  #allocation0 [shape = 'u32[]', space=smem, size = 0x4, offset = 0x4, fixed_abs, tag = 'smem constant byte address 0x4 - core index']
  #allocation1 [shape = 'u32[72,128]{1,0:T(1,128)}', space=vmem, size = 0x9000, scoped, tag = 'internal scratch']
  %s0 = inlined_call_operand.vmem [shape: f32[8,32], index: 0, kind: input, shape index: {}]
  %s1 = inlined_call_operand.vmem [shape: f32[8,64], index: 1, kind: input, shape index: {}]
  %s2 = inlined_call_operand.vmem [shape: f32[64,128], index: 2, kind: input, shape index: {}]
  %s3 = inlined_call_operand.vmem [shape: f32[1,128], index: 3, kind: input, shape index: {}]
  %s4 = inlined_call_operand.vmem [shape: f32[128,32], index: 4, kind: input, shape index: {}]
  %s5 = inlined_call_operand.vmem [shape: f32[1,32], index: 5, kind: input, shape index: {}]
  %s6 = inlined_call_operand.vmem [shape: f32[32,4], index: 6, kind: input, shape index: {}]
  %s7 = inlined_call_operand.vmem [shape: f32[1,4], index: 7, kind: input, shape index: {}]
  %s8 = inlined_call_operand.vmem [shape: f32[4,32], index: 8, kind: input, shape index: {}]
  %s9 = inlined_call_operand.vmem [shape: f32[32,8], index: 9, kind: input, shape index: {}]
  %s10 = inlined_call_operand.hbm [shape: f32[8,32], index: 10, kind: output, shape index: {0}]
  %s11 = inlined_call_operand.hbm [shape: f32[8,8], index: 11, kind: output, shape index: {1}]
  %12 = xla_tuple %s10, %s11
  %s13 = sld [smem:[#allocation0]]
  $region58: #{tpu_custom_call.1} parent=0
    _
  %s15 = ssub.s32 1, %s13
  %s16 = scalar_select 0, %s15, %s13
  $region1: #{tpu_custom_call.1} parent=0
    #allocation2 [shape = 'u8[4096]{0}', space=vmem, size = 0x1000, scoped, tag = 'output window, operand 0, single buffered']
    #allocation3 [shape = 's32[1]{0}', space=sflag, size = 0x4, scoped, tag = 'scoped memory for tpu_custom_call.1']
    #allocation4 [shape = 'u8[4096]{0}', space=vmem, size = 0x1000, scoped, tag = 'output window, operand 1, single buffered']
    #allocation5 [shape = 's32[1]{0}', space=sflag, size = 0x4, scoped, tag = 'scoped memory for tpu_custom_call.1']
    %17 = vsyncpa [#allocation3], 0
    %18 = vsyncpa [#allocation5], 0
    // Predicated region
    $region2: #{tpu_custom_call.1} parent=1 // pred_check
      _
    $region3: #{tpu_custom_call.1} parent=1 // pred_check_branch
      %20 = sbr.rel (0) target = $region5
    $region4: #{tpu_custom_call.1} parent=1 // pred_region
      _
    $region5: #{tpu_custom_call.1} parent=1 // pred_fallthru
      _
    // Predicated region
    $region6: #{tpu_custom_call.1} parent=1 // pred_check
      _
    $region7: #{tpu_custom_call.1} parent=1 // pred_check_branch
      %22 = sbr.rel (0) target = $region9
    $region8: #{tpu_custom_call.1} parent=1 // pred_region
      _
    $region9: #{tpu_custom_call.1} parent=1 // pred_fallthru
      _
    // Predicated region
    $region10: #{tpu_custom_call.1} parent=1 // pred_check
      _
    $region11: #{tpu_custom_call.1} parent=1 // pred_check_branch
      %24 = sbr.rel (0) target = $region13
    $region12: #{tpu_custom_call.1} parent=1 // pred_region
      _
    $region13: #{tpu_custom_call.1} parent=1 // pred_fallthru
      _
    // Predicated region
    $region14: #{tpu_custom_call.1} parent=1 // pred_check
      _
    $region15: #{tpu_custom_call.1} parent=1 // pred_check_branch
      %26 = sbr.rel (0) target = $region17
    $region16: #{tpu_custom_call.1} parent=1 // pred_region
      _
    $region17: #{tpu_custom_call.1} parent=1 // pred_fallthru
      _
    // Predicated region
    $region18: #{tpu_custom_call.1} parent=1 // pred_check
      _
    $region19: #{tpu_custom_call.1} parent=1 // pred_check_branch
      %28 = sbr.rel (0) target = $region21
    $region20: #{tpu_custom_call.1} parent=1 // pred_region
      _
    $region21: #{tpu_custom_call.1} parent=1 // pred_fallthru
      _
    // Predicated region
    $region22: #{tpu_custom_call.1} parent=1 // pred_check
      _
    $region23: #{tpu_custom_call.1} parent=1 // pred_check_branch
      %30 = sbr.rel (0) target = $region25
    $region24: #{tpu_custom_call.1} parent=1 // pred_region
      _
    $region25: #{tpu_custom_call.1} parent=1 // pred_fallthru
      _
    // Predicated region
    $region26: #{tpu_custom_call.1} parent=1 // pred_check
      _
    $region27: #{tpu_custom_call.1} parent=1 // pred_check_branch
      %32 = sbr.rel (0) target = $region29
    $region28: #{tpu_custom_call.1} parent=1 // pred_region
      _
    $region29: #{tpu_custom_call.1} parent=1 // pred_fallthru
      _
    // Predicated region
    $region30: #{tpu_custom_call.1} parent=1 // pred_check
      _
    $region31: #{tpu_custom_call.1} parent=1 // pred_check_branch
      %34 = sbr.rel (0) target = $region33
    $region32: #{tpu_custom_call.1} parent=1 // pred_region
      _
    $region33: #{tpu_custom_call.1} parent=1 // pred_fallthru
      _
    // Predicated region
    $region34: #{tpu_custom_call.1} parent=1 // pred_check
      _
    $region35: #{tpu_custom_call.1} parent=1 // pred_check_branch
      %36 = sbr.rel (0) target = $region37
    $region36: #{tpu_custom_call.1} parent=1 // pred_region
      _
    $region37: #{tpu_custom_call.1} parent=1 // pred_fallthru
      _
    // Predicated region
    $region38: #{tpu_custom_call.1} parent=1 // pred_check
      _
    $region39: #{tpu_custom_call.1} parent=1 // pred_check_branch
      %38 = sbr.rel (0) target = $region41
    $region40: #{tpu_custom_call.1} parent=1 // pred_region
      _
    $region41: #{tpu_custom_call.1} parent=1 // pred_fallthru
      _
    %v39 = vld [vmem:[%s0] sm:$0xff]
    %v40 = vld [vmem:[%s6] sm:$0xff]
    %v41 = vld [vmem:[%s6 + $0x8] sm:$0xff]
    %v42 = vld [vmem:[%s6 + $0x10] sm:$0xff]
    %v43 = vld [vmem:[%s6 + $0x18] sm:$0xff]
    %v44 = vld [vmem:[%s7] sm:$0x1]
    %v46 = vperm.slane %v44, 0
    %vm48 = vcmask 261120
    %v50 = vsel %vm48, %v39, 0
    %52 = vmatpush.msra.mxu0 0.0
    %53 = vmatpush.msra.mxu0 0.0
    %54 = vmatpush.msra.mxu0 0.0
    %55 = vmatpush.msra.mxu0 0.0
    %56 = vmatpush.msra.mxu0 0.0
    %57 = vmatpush.msra.mxu0 0.0
    %58 = vmatpush.msra.mxu0 0.0
    %59 = vmatpush.msra.mxu0 0.0
    %60 = vmatpush.msra.mxu0 0.0
    %61 = vmatpush.msra.mxu0 0.0
    %62 = vmatpush.msra.mxu0 0.0
    %63 = vmatpush.msra.mxu0 0.0
    %64 = vmatpush.msra.mxu0 %v43
    %65 = vmatpush.msra.mxu0 %v42
    %66 = vmatpush.msra.mxu0 %v41
    %67 = vmatpush.msra.mxu0 %v40
    %68 = vmatmul.f32.gmra.mxu0 %v50
    %v69 = vpop.f32.mrf.mxu0
    %v70 = vadd.f32 %v46, %v69
    %71 = vdwg.mxu0
    %vm72 = vcmask 31744
    %v73 = vsel %vm72, %v70, -inf
    %74 = vmax.xlane.f32.xlu0 %v73
    %v75 = vpop.xlane.xlu0 %74
    %v76 = vsub.f32 %v70, %v75
    %v77 = vmul.f32 %v76, 1.442695
    %v78 = vpow.pop %v77
    %v79 = vsel %vm72, %v78, 0.0
    %80 = vadd.xlane.f32.xlu0 %v79
    %v81 = vpop.xlane.xlu0 %80
    %v82 = vrcp.pop %v81
    %v83 = vmul.f32 %v81, %v82
    %v84 = vsub.f32 1.0, %v83
    %v85 = vmul.f32 %v82, %v84
    %v86 = vadd.f32 %v82, %v85
    %vm87 = vweird.f32 %v81
    %vm88 = vweird.f32 %v82
    %vm89 = vmor %vm87, %vm88
    %v90 = vsel %vm89, %v82, %v86
    %v91 = vand.u32 2147483647, %v81
    %vm92 = vcmp.eq.f32.partialorder %v91, 8.507059e+37
    %v93 = vand.u32 %v81, 2147483648
    %v94 = vor.u32 1.1754944e-38, %v93
    %v95 = vsel %vm92, %v94, %v90
    %v96 = vmul.f32 %v78, %v95
    %v97 = vld [vmem:[%s1] sm:$0xff]
    %v98 = vld [vmem:[%s2] sm:$0xff]
    %v99 = vld [vmem:[%s2 + $0x8] sm:$0xff]
    %v100 = vld [vmem:[%s2 + $0x10] sm:$0xff]
    %v101 = vld [vmem:[%s2 + $0x18] sm:$0xff]
    %v102 = vld [vmem:[%s2 + $0x20] sm:$0xff]
    %v103 = vld [vmem:[%s2 + $0x28] sm:$0xff]
    %v104 = vld [vmem:[%s2 + $0x30] sm:$0xff]
    %v105 = vld [vmem:[%s2 + $0x38] sm:$0xff]
    %v106 = vld [vmem:[%s3] sm:$0x1]
    %v108 = vperm.slane %v106, 0
    %vm110 = vcmask 523264
    %v112 = vsel %vm110, %v97, 0
    %114 = vmatpush.msra.mxu0 0.0
    %115 = vmatpush.msra.mxu0 0.0
    %116 = vmatpush.msra.mxu0 0.0
    %117 = vmatpush.msra.mxu0 0.0
    %118 = vmatpush.msra.mxu0 0.0
    %119 = vmatpush.msra.mxu0 0.0
    %120 = vmatpush.msra.mxu0 0.0
    %121 = vmatpush.msra.mxu0 0.0
    %122 = vmatpush.msra.mxu0 %v105
    %123 = vmatpush.msra.mxu0 %v104
    %124 = vmatpush.msra.mxu0 %v103
    %125 = vmatpush.msra.mxu0 %v102
    %126 = vmatpush.msra.mxu0 %v101
    %127 = vmatpush.msra.mxu0 %v100
    %128 = vmatpush.msra.mxu0 %v99
    %129 = vmatpush.msra.mxu0 %v98
    %130 = vmatmul.f32.gmra.mxu0 %v112
    %v131 = vpop.f32.mrf.mxu0
    %v132 = vadd.f32 %v108, %v131
    %133 = vdwg.mxu0
    %v134 = vmax.f32 %v132, 0.0
    %v135 = vmin.f32 %v134, 6.0
    %v136 = vld [vmem:[%s4] sm:$0xff]
    %v137 = vld [vmem:[%s4 + $0x8] sm:$0xff]
    %v138 = vld [vmem:[%s4 + $0x10] sm:$0xff]
    %v139 = vld [vmem:[%s4 + $0x18] sm:$0xff]
    %v140 = vld [vmem:[%s4 + $0x20] sm:$0xff]
    %v141 = vld [vmem:[%s4 + $0x28] sm:$0xff]
    %v142 = vld [vmem:[%s4 + $0x30] sm:$0xff]
    %v143 = vld [vmem:[%s4 + $0x38] sm:$0xff]
    %v144 = vld [vmem:[%s4 + $0x40] sm:$0xff]
    %v145 = vld [vmem:[%s4 + $0x48] sm:$0xff]
    %v146 = vld [vmem:[%s4 + $0x50] sm:$0xff]
    %v147 = vld [vmem:[%s4 + $0x58] sm:$0xff]
    %v148 = vld [vmem:[%s4 + $0x60] sm:$0xff]
    %v149 = vld [vmem:[%s4 + $0x68] sm:$0xff]
    %v150 = vld [vmem:[%s4 + $0x70] sm:$0xff]
    %v151 = vld [vmem:[%s4 + $0x78] sm:$0xff]
    %v152 = vld [vmem:[%s5] sm:$0x1]
    %v154 = vperm.slane %v152, 0
    %156 = vmatpush.msra.mxu0 %v151
    %157 = vmatpush.msra.mxu0 %v150
    %158 = vmatpush.msra.mxu0 %v149
    %159 = vmatpush.msra.mxu0 %v148
    %160 = vmatpush.msra.mxu0 %v147
    %161 = vmatpush.msra.mxu0 %v146
    %162 = vmatpush.msra.mxu0 %v145
    %163 = vmatpush.msra.mxu0 %v144
    %164 = vmatpush.msra.mxu0 %v143
    %165 = vmatpush.msra.mxu0 %v142
    %166 = vmatpush.msra.mxu0 %v141
    %167 = vmatpush.msra.mxu0 %v140
    %168 = vmatpush.msra.mxu0 %v139
    %169 = vmatpush.msra.mxu0 %v138
    %170 = vmatpush.msra.mxu0 %v137
    %171 = vmatpush.msra.mxu0 %v136
    %172 = vmatmul.f32.gmra.mxu0 %v135
    %v173 = vpop.f32.mrf.mxu0
    %v174 = vadd.f32 %v154, %v173
    %175 = vdwg.mxu0
    %v176 = vld [vmem:[%s8] sm:$0xf]
    %v178 = vsel %vm72, %v96, 0
    %vm180 = vcmask 1043456
    %v182 = vsel %vm180, %v176, 0
    %184 = vmatpush.msra.mxu0 0.0
    %185 = vmatpush.msra.mxu0 0.0
    %186 = vmatpush.msra.mxu0 0.0
    %187 = vmatpush.msra.mxu0 0.0
    %188 = vmatpush.msra.mxu0 0.0
    %189 = vmatpush.msra.mxu0 0.0
    %190 = vmatpush.msra.mxu0 0.0
    %191 = vmatpush.msra.mxu0 0.0
    %192 = vmatpush.msra.mxu0 0.0
    %193 = vmatpush.msra.mxu0 0.0
    %194 = vmatpush.msra.mxu0 0.0
    %195 = vmatpush.msra.mxu0 0.0
    %196 = vmatpush.msra.mxu0 0.0
    %197 = vmatpush.msra.mxu0 0.0
    %198 = vmatpush.msra.mxu0 0.0
    %199 = vmatpush.msra.mxu0 %v182
    %200 = vmatmul.f32.gmra.mxu0 %v178
    %v201 = vpop.f32.mrf.mxu0
    %v202 = vadd.f32 0.0, %v201
    %203 = vdwg.mxu0
    %v204 = vmul.f32 %v174, %v202
    %205 = vst.msk [vmem:[#allocation2] sm:$0xff] %vm48, %v204
    %v206 = vld [vmem:[%s9] sm:$0xff]
    %v207 = vld [vmem:[%s9 + $0x8] sm:$0xff]
    %v208 = vld [vmem:[%s9 + $0x10] sm:$0xff]
    %v209 = vld [vmem:[%s9 + $0x18] sm:$0xff]
    %v211 = vsel %vm48, %v204, 0
    %213 = vmatpush.msra.mxu0 0.0
    %214 = vmatpush.msra.mxu0 0.0
    %215 = vmatpush.msra.mxu0 0.0
    %216 = vmatpush.msra.mxu0 0.0
    %217 = vmatpush.msra.mxu0 0.0
    %218 = vmatpush.msra.mxu0 0.0
    %219 = vmatpush.msra.mxu0 0.0
    %220 = vmatpush.msra.mxu0 0.0
    %221 = vmatpush.msra.mxu0 0.0
    %222 = vmatpush.msra.mxu0 0.0
    %223 = vmatpush.msra.mxu0 0.0
    %224 = vmatpush.msra.mxu0 0.0
    %225 = vmatpush.msra.mxu0 %v209
    %226 = vmatpush.msra.mxu0 %v208
    %227 = vmatpush.msra.mxu0 %v207
    %228 = vmatpush.msra.mxu0 %v206
    %229 = vmatmul.f32.gmra.mxu0 %v211
    %v230 = vpop.f32.mrf.mxu0
    %v231 = vadd.f32 0.0, %v230
    %232 = vdwg.mxu0
    %vm233 = vcmask 64512
    %234 = vst.msk [vmem:[#allocation4] sm:$0xff] %vm233, %v231
    // Predicated region
    $region42: #{tpu_custom_call.1} parent=1 // pred_check
      _
    $region43: #{tpu_custom_call.1} parent=1 // pred_check_branch
      %236 = sbr.rel (0) target = $region45
    $region44: #{tpu_custom_call.1} parent=1 // pred_region
      %238 = vsyncadd [#allocation3], 0
      %s240 = sshll.u32 [#allocation2], 4
      %s241 = int_to_ptr.vmem [resolvable:$true] %s240
      %s242 = sshll.u32 %s10, 4
      %s243 = int_to_ptr.hbm [resolvable:$true] %s242
      %245 = dma.vmem_to_hbm [thread:$0]  %s241, 128, %s243, [#allocation3]
    $region45: #{tpu_custom_call.1} parent=1 // pred_fallthru
      _
    // Predicated region
    $region46: #{tpu_custom_call.1} parent=1 // pred_check
      _
    $region47: #{tpu_custom_call.1} parent=1 // pred_check_branch
      %247 = sbr.rel (0) target = $region49
    $region48: #{tpu_custom_call.1} parent=1 // pred_region
      %249 = vsyncadd [#allocation5], 0
      %s251 = sshll.u32 [#allocation4], 4
      %s252 = int_to_ptr.vmem [resolvable:$true] %s251
      %s253 = sshll.u32 %s11, 4
      %s254 = int_to_ptr.hbm [resolvable:$true] %s253
      %256 = dma.vmem_to_hbm [thread:$0]  %s252, 128, %s254, [#allocation5]
    $region49: #{tpu_custom_call.1} parent=1 // pred_fallthru
      _
    // Predicated region
    $region50: #{tpu_custom_call.1} parent=1 // pred_check
      _
    $region51: #{tpu_custom_call.1} parent=1 // pred_check_branch
      %258 = sbr.rel (0) target = $region53
    $region52: #{tpu_custom_call.1} parent=1 // pred_region
      %260 = dma.done [#allocation3], 128
    $region53: #{tpu_custom_call.1} parent=1 // pred_fallthru
      _
    // Predicated region
    $region54: #{tpu_custom_call.1} parent=1 // pred_check
      _
    $region55: #{tpu_custom_call.1} parent=1 // pred_check_branch
      %262 = sbr.rel (0) target = $region57
    $region56: #{tpu_custom_call.1} parent=1 // pred_region
      %264 = dma.done [#allocation5], 128
    $region57: #{tpu_custom_call.1} parent=1 // pred_fallthru
      _
    %265 = vsyncpa [#allocation3], 1
    %266 = vsyncpa [#allocation5], 1

</llo_original>
